<compile_context>
chip_gen: v7x
topology: tpu7x:2x2x1
jax: 0.10.0
libtpu: 0.0.40
codegen_flags: <defaults>
</compile_context>

<pallas_src>
import functools
import math

import jax
import jax.numpy as jnp
from jax.experimental import pallas as pl
from jax.experimental.pallas import tpu as pltpu


# ----------------------------- helpers --------------------------------------

_VMEM_LIMIT = 48 * 1024 * 1024  # headroom below v7x's 64 MiB physical VMEM


def _fit(dim, pref, align):
    """Largest tile <= pref that divides dim and is a multiple of align (or the full dim)."""
    if dim <= pref:
        return dim
    t = (pref // align) * align
    while t >= align:
        if dim % t == 0:
            return t
        t -= align
    return dim


def _gelu_tanh(x):
    # BERT gelu (tanh approximation; EUP-friendly inside the kernel)
    return 0.5 * x * (1.0 + jnp.tanh(0.7978845608028654 * (x + 0.044715 * x * x * x)))


def _vmem_specs(n):
    return [pl.BlockSpec(memory_space=pltpu.MemorySpace.VMEM) for _ in range(n)]


# ----------------------------- Pallas kernels ------------------------------

def _linear_kernel(*refs, act, fuse_ln, eps):
    # Tiled matmul with f32 accumulator; optional activation and fused residual+LayerNorm.
    if fuse_ln:
        x_ref, w_ref, b_ref, r_ref, g_ref, be_ref, o_ref, acc_ref = refs
    else:
        x_ref, w_ref, b_ref, o_ref, acc_ref = refs

    k = pl.program_id(2)

    @pl.when(k == 0)
    def _():
        acc_ref[...] = jnp.zeros_like(acc_ref)

    acc_ref[...] += jnp.dot(x_ref[...], w_ref[...],
                            preferred_element_type=jnp.float32)

    @pl.when(k == pl.num_programs(2) - 1)
    def _():
        y = acc_ref[...] + b_ref[...].astype(jnp.float32)
        if act == "relu":
            y = jnp.maximum(y, 0.0)
        elif act == "gelu":
            y = _gelu_tanh(y)
        elif act == "tanh":
            y = jnp.tanh(y)
        if fuse_ln:
            y = y + r_ref[...].astype(jnp.float32)
            mu = jnp.mean(y, axis=-1, keepdims=True)
            var = jnp.mean((y - mu) * (y - mu), axis=-1, keepdims=True)
            y = (y - mu) * jax.lax.rsqrt(var + eps)
            y = y * g_ref[...].astype(jnp.float32) + be_ref[...].astype(jnp.float32)
        o_ref[...] = y.astype(o_ref.dtype)


def _ln_kernel(x_ref, g_ref, b_ref, o_ref, *, eps):
    # LayerNorm over the last axis (no residual stream -> no wasted zeros DMA).
    x = x_ref[...].astype(jnp.float32)
    mu = jnp.mean(x, axis=-1, keepdims=True)
    var = jnp.mean((x - mu) * (x - mu), axis=-1, keepdims=True)
    y = (x - mu) * jax.lax.rsqrt(var + eps)
    o_ref[...] = (y * g_ref[...].astype(jnp.float32)
                  + b_ref[...].astype(jnp.float32)).astype(o_ref.dtype)


def _flash_attn_kernel(q_ref, k_ref, v_ref, m_ref, o_ref,
                       m_sc, l_sc, acc_sc, *, scale):
    # Online-softmax attention over kv tiles. Blocks: q/o (1,tq,DH), k/v (1,tk,DH),
    # mask (1,1,tk) additive mask broadcast over the query axis.
    ki = pl.program_id(2)

    @pl.when(ki == 0)
    def _():
        m_sc[...] = jnp.full_like(m_sc, -jnp.inf)
        l_sc[...] = jnp.zeros_like(l_sc)
        acc_sc[...] = jnp.zeros_like(acc_sc)

    q = q_ref[0]                       # (tq, DH) bf16
    k = k_ref[0]                       # (tk, DH) bf16
    v = v_ref[0]                       # (tk, DH) bf16
    s = jnp.dot(q, k.T, preferred_element_type=jnp.float32) * scale     # (tq, tk) f32
    s = s + m_ref[0]                                                    # (1, tk) broadcast

    m_prev = m_sc[0]                                                    # (tq, 1)
    m_new = jnp.maximum(m_prev, jnp.max(s, axis=-1, keepdims=True))
    alpha = jnp.exp(m_prev - m_new)
    p = jnp.exp(s - m_new)
    l_sc[0] = alpha * l_sc[0] + jnp.sum(p, axis=-1, keepdims=True)
    acc_sc[0] = alpha * acc_sc[0] + jnp.dot(p.astype(v.dtype), v,
                                            preferred_element_type=jnp.float32)
    m_sc[0] = m_new

    @pl.when(ki == pl.num_programs(2) - 1)
    def _():
        inv_l = pl.reciprocal(l_sc[0], approx=True)
        o_ref[0] = (acc_sc[0] * inv_l).astype(o_ref.dtype)


def _head_loss_kernel(x_ref, w1_ref, b1_ref, w2_ref, b2_ref, y_ref,
                      logit_ref, loss_ref):
    # hidden Linear -> ReLU -> fc Linear -> BCEWithLogitsLoss(mean), fully fused.
    h = jnp.dot(x_ref[...], w1_ref[...],
                preferred_element_type=jnp.float32) + b1_ref[...]
    h = jnp.maximum(h, 0.0)
    z = jnp.dot(h.astype(w2_ref.dtype), w2_ref[...],
                preferred_element_type=jnp.float32) + b2_ref[...]
    logit_ref[...] = z
    t = y_ref[...].astype(jnp.float32)
    per = jnp.maximum(z, 0.0) - z * t + jnp.log(1.0 + jnp.exp(-jnp.abs(z)))
    n = z.shape[0] * z.shape[1]
    loss_ref[...] = jnp.sum(per, axis=(0, 1), keepdims=True) / n


def _head_kernel(x_ref, w1_ref, b1_ref, w2_ref, b2_ref, logit_ref):
    h = jnp.dot(x_ref[...], w1_ref[...],
                preferred_element_type=jnp.float32) + b1_ref[...]
    h = jnp.maximum(h, 0.0)
    z = jnp.dot(h.astype(w2_ref.dtype), w2_ref[...],
                preferred_element_type=jnp.float32) + b2_ref[...]
    logit_ref[...] = z


# ----------------------------- pallas_call wrappers -------------------------

def linear(x, w, b, residual=None, gamma=None, beta=None, act="none",
           eps=1e-12, tm=256, tn=512, tk=512, out_dtype=jnp.bfloat16):
    """y = act(x @ w + b); optionally followed by LayerNorm(y + residual) * gamma + beta.

    x: [M, K] bf16, w: [K, N] bf16 (already transposed vs torch Linear), b: [N] f32.
    """
    M, K = x.shape
    N = w.shape[1]
    fuse_ln = gamma is not None

    tm = _fit(M, tm, 8)
    tk = _fit(K, tk, 128)
    tn = N if fuse_ln else _fit(N, tn, 128)   # LayerNorm needs the full hidden axis
    grid = (M // tm, N // tn, K // tk)

    in_specs = [
        pl.BlockSpec((tm, tk), lambda i, j, k: (i, k)),
        # weight index_map ignores the M grid axis -> weight tile stays resident while
        # activation row-tiles stream.
        pl.BlockSpec((tk, tn), lambda i, j, k: (k, j)),
        pl.BlockSpec((1, tn), lambda i, j, k: (0, j)),
    ]
    operands = [x, w, b.reshape(1, N).astype(jnp.float32)]
    if fuse_ln:
        in_specs += [
            # index_map independent of k -> residual / gamma / beta blocks stay resident
            # across the whole K reduction (one DMA per (i, j) output tile).
            pl.BlockSpec((tm, N), lambda i, j, k: (i, 0)),
            pl.BlockSpec((1, N), lambda i, j, k: (0, 0)),
            pl.BlockSpec((1, N), lambda i, j, k: (0, 0)),
        ]
        operands += [residual, gamma.reshape(1, N).astype(jnp.float32),
                     beta.reshape(1, N).astype(jnp.float32)]

    cost = pl.CostEstimate(
        flops=2 * M * N * K,
        transcendentals=M * N if act in ("gelu", "tanh") else 0,
        bytes_accessed=2 * (M * K + K * N + M * N),
    )

    return pl.pallas_call(
        functools.partial(_linear_kernel, act=act, fuse_ln=fuse_ln, eps=eps),
        out_shape=jax.ShapeDtypeStruct((M, N), out_dtype),
        grid=grid,
        in_specs=in_specs,
        out_specs=pl.BlockSpec((tm, tn), lambda i, j, k: (i, j)),
        scratch_shapes=[pltpu.VMEM((tm, tn), jnp.float32)],
        compiler_params=pltpu.CompilerParams(
            dimension_semantics=("parallel", "parallel", "arbitrary"),
            vmem_limit_bytes=_VMEM_LIMIT),
        cost_estimate=cost,
    )(*operands)


def layernorm(x, gamma, beta, eps=1e-12, tm=512, out_dtype=jnp.bfloat16):
    M, H = x.shape
    tm = _fit(M, tm, 8)
    return pl.pallas_call(
        functools.partial(_ln_kernel, eps=eps),
        out_shape=jax.ShapeDtypeStruct((M, H), out_dtype),
        grid=(M // tm,),
        in_specs=[pl.BlockSpec((tm, H), lambda i: (i, 0)),
                  pl.BlockSpec((1, H), lambda i: (0, 0)),
                  pl.BlockSpec((1, H), lambda i: (0, 0))],
        out_specs=pl.BlockSpec((tm, H), lambda i: (i, 0)),
        compiler_params=pltpu.CompilerParams(
            dimension_semantics=("parallel",),
            vmem_limit_bytes=_VMEM_LIMIT),
    )(x, gamma.reshape(1, H).astype(jnp.float32),
      beta.reshape(1, H).astype(jnp.float32))


def flash_attention(q, k, v, addmask, scale, num_heads, tq=256, tkv=512):
    """q,k,v: [B*NH, S, DH] bf16; addmask: [B, 1, S] f32 additive mask (shared per head)."""
    BH, S, DH = q.shape
    tq = _fit(S, tq, 8)
    tkv = _fit(S, tkv, 128)
    grid = (BH, S // tq, S // tkv)
    nh = num_heads

    return pl.pallas_call(
        functools.partial(_flash_attn_kernel, scale=scale),
        out_shape=jax.ShapeDtypeStruct((BH, S, DH), q.dtype),
        grid=grid,
        in_specs=[
            pl.BlockSpec((1, tq, DH), lambda b, qi, ki: (b, qi, 0)),
            pl.BlockSpec((1, tkv, DH), lambda b, qi, ki: (b, ki, 0)),
            pl.BlockSpec((1, tkv, DH), lambda b, qi, ki: (b, ki, 0)),
            # mask is [B, 1, S]; the head axis is folded into the leading grid axis, so map
            # grid index b -> batch index b // NH (no per-head replication in HBM).
            pl.BlockSpec((1, 1, tkv), lambda b, qi, ki: (b // nh, 0, ki)),
        ],
        out_specs=pl.BlockSpec((1, tq, DH), lambda b, qi, ki: (b, qi, 0)),
        scratch_shapes=[pltpu.VMEM((1, tq, 1), jnp.float32),
                        pltpu.VMEM((1, tq, 1), jnp.float32),
                        pltpu.VMEM((1, tq, DH), jnp.float32)],
        compiler_params=pltpu.CompilerParams(
            dimension_semantics=("parallel", "parallel", "arbitrary"),
            vmem_limit_bytes=_VMEM_LIMIT),
        cost_estimate=pl.CostEstimate(flops=4 * BH * S * S * DH,
                                      transcendentals=BH * S * S,
                                      bytes_accessed=2 * 4 * BH * S * DH),
    )(q, k, v, addmask)


def classification_head(pooled, w1, b1, w2, b2, labels=None):
    m = pooled.shape[0]
    c = w2.shape[1]
    b1 = b1.reshape(1, -1).astype(jnp.float32)
    b2 = b2.reshape(1, -1).astype(jnp.float32)
    if labels is None:
        return pl.pallas_call(
            _head_kernel,
            out_shape=jax.ShapeDtypeStruct((m, c), jnp.float32),
            in_specs=_vmem_specs(5),
            out_specs=pl.BlockSpec(memory_space=pltpu.MemorySpace.VMEM),
        )(pooled, w1, b1, w2, b2)
    logits, loss = pl.pallas_call(
        _head_loss_kernel,
        out_shape=(jax.ShapeDtypeStruct((m, c), jnp.float32),
                   jax.ShapeDtypeStruct((1, 1), jnp.float32)),
        in_specs=_vmem_specs(6),
        out_specs=(pl.BlockSpec(memory_space=pltpu.MemorySpace.VMEM),
                   pl.BlockSpec(memory_space=pltpu.MemorySpace.VMEM)),
    )(pooled, w1, b1, w2, b2, labels)
    return logits, loss[0, 0]


# ----------------------------- parameters ----------------------------------

def _dense_init(key, fan_in, fan_out, scale=0.02, dtype=jnp.bfloat16):
    return (scale * jax.random.normal(key, (fan_in, fan_out), jnp.float32)).astype(dtype), \
        jnp.zeros((fan_out,), jnp.float32)


def init_params(key, cfg):
    H, I, L = cfg["hidden"], cfg["inter"], cfg["layers"]
    p = {}
    keys = jax.random.split(key, 8 + 8 * L)
    it = iter(keys)
    p["word_emb"] = (0.02 * jax.random.normal(next(it), (cfg["vocab"], H), jnp.float32)
                     ).astype(jnp.bfloat16)
    p["pos_emb"] = (0.02 * jax.random.normal(next(it), (cfg["max_pos"], H), jnp.float32)
                    ).astype(jnp.bfloat16)
    p["type_emb"] = (0.02 * jax.random.normal(next(it), (cfg["type_vocab"], H), jnp.float32)
                     ).astype(jnp.bfloat16)
    p["emb_ln_g"], p["emb_ln_b"] = jnp.ones((H,), jnp.float32), jnp.zeros((H,), jnp.float32)

    layers = []
    for _ in range(L):
        lp = {}
        wq, bq = _dense_init(next(it), H, H)
        wk, bk = _dense_init(next(it), H, H)
        wv, bv = _dense_init(next(it), H, H)
        # fused QKV projection: one [H, 3H] matmul per layer
        lp["wqkv"] = jnp.concatenate([wq, wk, wv], axis=1)
        lp["bqkv"] = jnp.concatenate([bq, bk, bv], axis=0)
        lp["wo"], lp["bo"] = _dense_init(next(it), H, H)
        lp["ln1_g"], lp["ln1_b"] = jnp.ones((H,), jnp.float32), jnp.zeros((H,), jnp.float32)
        lp["wi"], lp["bi"] = _dense_init(next(it), H, I)
        lp["wf"], lp["bf"] = _dense_init(next(it), I, H)
        lp["ln2_g"], lp["ln2_b"] = jnp.ones((H,), jnp.float32), jnp.zeros((H,), jnp.float32)
        layers.append(lp)
    p["layers"] = layers

    p["pooler_w"], p["pooler_b"] = _dense_init(next(it), H, H)
    # head: self.hidden (H->H) and self.fc (H->num_class)
    p["hidden_w"], p["hidden_b"] = _dense_init(next(it), H, H)
    p["fc_w"], p["fc_b"] = _dense_init(next(it), H, cfg["num_class"])
    return p


# ----------------------------- forward --------------------------------------

def bert_encoder(params, cfg, input_ids, attention_mask, token_type_ids):
    B, S = input_ids.shape
    H, NH = cfg["hidden"], cfg["heads"]
    DH = H // NH
    M = B * S

    # embeddings (gathers are plain-JAX glue), summed in f32, then LN-only kernel.
    emb = (params["word_emb"][input_ids].astype(jnp.float32)
           + params["pos_emb"][jnp.arange(S)][None, :, :].astype(jnp.float32)
           + params["type_emb"][token_type_ids].astype(jnp.float32))
    x2d = layernorm(emb.reshape(M, H), params["emb_ln_g"], params["emb_ln_b"])

    # additive attention mask, one copy per batch row: [B, 1, S]
    addmask = ((1.0 - attention_mask.astype(jnp.float32)) * -10000.0).reshape(B, 1, S)

    def split_qkv(t):   # [B*S, 3H] -> 3 x [B*NH, S, DH]
        t = t.reshape(B, S, 3, NH, DH).transpose(2, 0, 3, 1, 4).reshape(3, B * NH, S, DH)
        return t[0], t[1], t[2]

    def merge_heads(t):  # [B*NH, S, DH] -> [B*S, H]
        return t.reshape(B, NH, S, DH).transpose(0, 2, 1, 3).reshape(M, H)

    scale = 1.0 / math.sqrt(DH)
    for lp in params["layers"]:
        qkv = linear(x2d, lp["wqkv"], lp["bqkv"])                    # fused QKV proj
        q, k, v = split_qkv(qkv)
        ctx = merge_heads(flash_attention(q, k, v, addmask, scale, NH))
        # output projection with fused residual-add + LayerNorm
        x2d = linear(ctx, lp["wo"], lp["bo"],
                     residual=x2d, gamma=lp["ln1_g"], beta=lp["ln1_b"])
        ffn = linear(x2d, lp["wi"], lp["bi"], act="gelu")
        # second FFN linear with fused residual-add + LayerNorm
        x2d = linear(ffn, lp["wf"], lp["bf"],
                     residual=x2d, gamma=lp["ln2_g"], beta=lp["ln2_b"])

    seq_out = x2d.reshape(B, S, H)
    cls = seq_out[:, 0, :]                                           # [B, H]
    pooled = linear(cls, params["pooler_w"], params["pooler_b"], act="tanh")
    return seq_out, pooled


def model_forward(params, cfg, task, label_tensor=None):
    content, mask, token_type_ids = task
    _, pooled = bert_encoder(params, cfg, content, mask, token_type_ids)
    if label_tensor is None:
        return classification_head(pooled, params["hidden_w"], params["hidden_b"],
                                   params["fc_w"], params["fc_b"])
    logits, loss = classification_head(pooled, params["hidden_w"], params["hidden_b"],
                                       params["fc_w"], params["fc_b"],
                                       labels=label_tensor.astype(jnp.float32))
    return logits, loss


# ----------------------------- main ------------------------------------------

if __name__ == "__main__":
    cfg = dict(vocab=96, max_pos=32, type_vocab=2, hidden=32, heads=2,
               layers=2, inter=64, num_class=4)
    B, S = 2, 8

    key = jax.random.PRNGKey(0)
    kp, k1, k2 = jax.random.split(key, 3)
    params = init_params(kp, cfg)

    input_ids = jax.random.randint(k1, (B, S), 0, cfg["vocab"], dtype=jnp.int32)
    attention_mask = jnp.array([[1, 1, 1, 1, 1, 1, 1, 1],
                                [1, 1, 1, 1, 1, 1, 0, 0]], dtype=jnp.float32)
    token_type_ids = jnp.zeros((B, S), dtype=jnp.int32)
    labels = jax.random.bernoulli(k2, 0.5, (B, cfg["num_class"])).astype(jnp.float32)

    logits, loss = model_forward(params, cfg,
                                 (input_ids, attention_mask, token_type_ids), labels)
    jax.block_until_ready((logits, loss))
    assert logits.shape == (B, cfg["num_class"])
    assert loss.shape == ()
    print("KERNEL_OK")
</pallas_src>

<mosaic_0001>
module attributes {stable_mosaic.version = 11 : i64} {
  func.func @_ln_kernel(%arg0: i32, %arg1: memref<16x32xf32, #tpu.memory_space<vmem>>, %arg2: memref<1x32xf32, #tpu.memory_space<vmem>>, %arg3: memref<1x32xf32, #tpu.memory_space<vmem>>, %arg4: memref<16x32xbf16, #tpu.memory_space<vmem>>) attributes {dimension_semantics = [#tpu.dimension_semantics<parallel>], iteration_bounds = array<i64: 1>, scalar_prefetch = 0 : i64, scratch_operands = 0 : i64, tpu.core_type = #tpu.core_type<tc>, window_params = [{transform_indices = @transform_0, window_bounds = array<i64: 16, 32>}, {pipeline_mode = #tpu.pipeline_mode<synchronous>, transform_indices = @transform_1, window_bounds = array<i64: 1, 32>}, {pipeline_mode = #tpu.pipeline_mode<synchronous>, transform_indices = @transform_2, window_bounds = array<i64: 1, 32>}, {transform_indices = @transform_3, window_bounds = array<i64: 16, 32>}]} {
    %c0 = arith.constant 0 : index
    %c0_0 = arith.constant 0 : index
    %0 = vector.load %arg1[%c0, %c0_0] : memref<16x32xf32, #tpu.memory_space<vmem>>, vector<16x32xf32>
    %cst = arith.constant dense<0.000000e+00> : vector<16xf32>
    %1 = vector.multi_reduction <add>, %0, %cst [1] : vector<16x32xf32> to vector<16xf32>
    %2 = vector.shape_cast %1 : vector<16xf32> to vector<16x1xf32>
    %cst_1 = arith.constant 3.200000e+01 : f32
    %3 = vector.broadcast %cst_1 : f32 to vector<16x1xf32>
    %4 = arith.divf %2, %3 : vector<16x1xf32>
    %5 = vector.broadcast %4 : vector<16x1xf32> to vector<16x32xf32>
    %6 = arith.subf %0, %5 : vector<16x32xf32>
    %7 = vector.broadcast %4 : vector<16x1xf32> to vector<16x32xf32>
    %8 = arith.subf %0, %7 : vector<16x32xf32>
    %9 = arith.mulf %6, %8 : vector<16x32xf32>
    %cst_2 = arith.constant dense<0.000000e+00> : vector<16xf32>
    %10 = vector.multi_reduction <add>, %9, %cst_2 [1] : vector<16x32xf32> to vector<16xf32>
    %11 = vector.shape_cast %10 : vector<16xf32> to vector<16x1xf32>
    %cst_3 = arith.constant 3.200000e+01 : f32
    %12 = vector.broadcast %cst_3 : f32 to vector<16x1xf32>
    %13 = arith.divf %11, %12 : vector<16x1xf32>
    %14 = vector.broadcast %4 : vector<16x1xf32> to vector<16x32xf32>
    %15 = arith.subf %0, %14 : vector<16x32xf32>
    %cst_4 = arith.constant 9.99999996E-13 : f32
    %16 = vector.broadcast %cst_4 : f32 to vector<16x1xf32>
    %17 = arith.addf %13, %16 : vector<16x1xf32>
    %18 = math.rsqrt %17 : vector<16x1xf32>
    %19 = vector.broadcast %18 : vector<16x1xf32> to vector<16x32xf32>
    %20 = arith.mulf %15, %19 : vector<16x32xf32>
    %c0_5 = arith.constant 0 : index
    %c0_6 = arith.constant 0 : index
    %21 = vector.load %arg2[%c0_5, %c0_6] : memref<1x32xf32, #tpu.memory_space<vmem>>, vector<1x32xf32>
    %22 = vector.broadcast %21 : vector<1x32xf32> to vector<16x32xf32>
    %23 = arith.mulf %20, %22 : vector<16x32xf32>
    %c0_7 = arith.constant 0 : index
    %c0_8 = arith.constant 0 : index
    %24 = vector.load %arg3[%c0_7, %c0_8] : memref<1x32xf32, #tpu.memory_space<vmem>>, vector<1x32xf32>
    %25 = vector.broadcast %24 : vector<1x32xf32> to vector<16x32xf32>
    %26 = arith.addf %23, %25 : vector<16x32xf32>
    %27 = arith.truncf %26 : vector<16x32xf32> to vector<16x32xbf16>
    %c0_9 = arith.constant 0 : index
    %c0_10 = arith.constant 0 : index
    %28 = vector.load %arg4[%c0_9, %c0_10] : memref<16x32xbf16, #tpu.memory_space<vmem>>, vector<16x32xbf16>
    tpu.vector_store %arg4[%c0_9, %c0_10], %27 {strides = array<i32>} : memref<16x32xbf16, #tpu.memory_space<vmem>>, vector<16x32xbf16>,
    return
  }
  func.func @transform_0(%arg0: i32) -> (i32, i32) {
    %c0_i32 = arith.constant 0 : i32
    %c0_i32_0 = arith.constant 0 : i32
    return %arg0, %c0_i32 : i32, i32
  }
  func.func @transform_1(%arg0: i32) -> (i32, i32) {
    %c0_i32 = arith.constant 0 : i32
    %c0_i32_0 = arith.constant 0 : i32
    %c0_i32_1 = arith.constant 0 : i32
    return %c0_i32, %c0_i32_0 : i32, i32
  }
  func.func @transform_2(%arg0: i32) -> (i32, i32) {
    %c0_i32 = arith.constant 0 : i32
    %c0_i32_0 = arith.constant 0 : i32
    %c0_i32_1 = arith.constant 0 : i32
    return %c0_i32, %c0_i32_0 : i32, i32
  }
  func.func @transform_3(%arg0: i32) -> (i32, i32) {
    %c0_i32 = arith.constant 0 : i32
    %c0_i32_0 = arith.constant 0 : i32
    return %arg0, %c0_i32 : i32, i32
  }
}

</mosaic_0001>

<llo_original>
// kernel: tpu_custom_call.1
$region0: #{tpu_custom_call.1}
  #allocation0 [shape = 'u32[]', space=smem, size = 0x4, offset = 0x4, fixed_abs, tag = 'smem constant byte address 0x4 - core index']
  #allocation1 [shape = 'u32[144,128]{1,0:T(1,128)}', space=vmem, size = 0x12000, scoped, tag = 'internal scratch']
  %s0 = inlined_call_operand.hbm [shape: f32[16,32], index: 0, kind: input, shape index: {}]
  %s1 = inlined_call_operand.vmem [shape: f32[1,32], index: 1, kind: input, shape index: {}]
  %s2 = inlined_call_operand.vmem [shape: f32[1,32], index: 2, kind: input, shape index: {}]
  %s3 = inlined_call_operand.hbm [shape: bf16[16,32], index: 3, kind: output, shape index: {}]
  %s4 = sld [smem:[#allocation0]]
  $region26: #{tpu_custom_call.1} parent=0
    _
  %s6 = ssub.s32 1, %s4
  %s7 = scalar_select 0, %s6, %s4
  $region1: #{tpu_custom_call.1} parent=0
    #allocation2 [shape = 'u8[8192]{0}', space=vmem, size = 0x2000, scoped, tag = 'input window, operand 0, single buffered']
    #allocation3 [shape = 's32[1]{0}', space=sflag, size = 0x4, scoped, tag = 'scoped memory for tpu_custom_call.1']
    #allocation4 [shape = 's32[1]{0}', space=sflag, size = 0x4, scoped, tag = 'scoped memory for tpu_custom_call.1']
    #allocation5 [shape = 'u8[4096]{0}', space=vmem, size = 0x1000, scoped, tag = 'output window, operand 0, single buffered']
    %8 = vsyncpa [#allocation3], 0
    %9 = vsyncpa [#allocation4], 0
    // Predicated region
    $region2: #{tpu_custom_call.1} parent=1 // pred_check
      _
    $region3: #{tpu_custom_call.1} parent=1 // pred_check_branch
      %11 = sbr.rel (0) target = $region5
    $region4: #{tpu_custom_call.1} parent=1 // pred_region
      %s13 = ssub.s32 256, 256
      %14 = vsyncadd [#allocation3], %s13
      %s15 = sshll.u32 [#allocation2], 4
      %s16 = int_to_ptr.vmem [resolvable:$true] %s15
      %21 = dma.hbm_to_vmem [thread:$0]  %s0, 256, %s16, [#allocation3], 128, 128, 8
    $region5: #{tpu_custom_call.1} parent=1 // pred_fallthru
      _
    // Predicated region
    $region6: #{tpu_custom_call.1} parent=1 // pred_check
      _
    $region7: #{tpu_custom_call.1} parent=1 // pred_check_branch
      %23 = sbr.rel (0) target = $region9
    $region8: #{tpu_custom_call.1} parent=1 // pred_region
      _
    $region9: #{tpu_custom_call.1} parent=1 // pred_fallthru
      _
    // Predicated region
    $region10: #{tpu_custom_call.1} parent=1 // pred_check
      _
    $region11: #{tpu_custom_call.1} parent=1 // pred_check_branch
      %25 = sbr.rel (0) target = $region13
    $region12: #{tpu_custom_call.1} parent=1 // pred_region
      _
    $region13: #{tpu_custom_call.1} parent=1 // pred_fallthru
      _
    // Predicated region
    $region14: #{tpu_custom_call.1} parent=1 // pred_check
      _
    $region15: #{tpu_custom_call.1} parent=1 // pred_check_branch
      %27 = sbr.rel (0) target = $region17
    $region16: #{tpu_custom_call.1} parent=1 // pred_region
      %28 = dma.done [#allocation3], 256
    $region17: #{tpu_custom_call.1} parent=1 // pred_fallthru
      _
    %v29 = vld [vmem:[#allocation2] sm:$0xff]
    %v30 = vld [vmem:[#allocation2 + $0x8] sm:$0xff]
    %vm31 = vcmask 261120
    %v32 = vsel %vm31, %v29, 0.0
    %33 = vadd.xlane.f32.xlu0 %v32
    %v34 = vpop.xlane.xlu0 %33
    %v35 = vsel %vm31, %v30, 0.0
    %36 = vadd.xlane.f32.xlu0 %v35
    %v37 = vpop.xlane.xlu0 %36
    %v38 = vrcp.pop 32.0
    %v39 = vmul.f32 %v34, %v38
    %v40 = vmul.f32 %v37, %v38
    %v41 = vsub.f32 %v29, %v39
    %v42 = vsub.f32 %v30, %v40
    %v43 = vmul.f32 %v41, %v41
    %v44 = vmul.f32 %v42, %v42
    %v45 = vsel %vm31, %v43, 0.0
    %46 = vadd.xlane.f32.xlu0 %v45
    %v47 = vpop.xlane.xlu0 %46
    %v48 = vsel %vm31, %v44, 0.0
    %49 = vadd.xlane.f32.xlu0 %v48
    %v50 = vpop.xlane.xlu0 %49
    %v51 = vmul.f32 %v47, %v38
    %v52 = vmul.f32 %v50, %v38
    %v53 = vadd.f32 %v51, 1e-12
    %v54 = vadd.f32 %v52, 1e-12
    %v55 = vrsqrt.pop %v53
    %v56 = vrsqrt.pop %v54
    %v57 = vmul.f32 %v41, %v55
    %v58 = vmul.f32 %v42, %v56
    %v59 = vld [vmem:[%s1] sm:$0x1]
    %v61 = vlaneseq
    %v62 = vshrl.u32 %v61, 7
    %v63 = vsub.s32 0, %v62
    %v64 = vrot.slane %v59, %v63
    %v66 = vmul.f32 %v57, %v64
    %v67 = vmul.f32 %v58, %v64
    %v68 = vld [vmem:[%s2] sm:$0x1]
    %v70 = vlaneseq
    %v71 = vshrl.u32 %v70, 7
    %v72 = vsub.s32 0, %v71
    %v73 = vrot.slane %v68, %v72
    %v75 = vadd.f32 %v66, %v73
    %v76 = vadd.f32 %v67, %v73
    %v77 = vpack.c.bf16 %v76, %v75
    %v79 = vunpack.c.l.b16 %v77
    %v80 = vunpack.c.h.b16 %v77
    %v81 = vpack.c.b16 %v79, %v79
    %v82 = vpack.c.b16 %v80, %v80
    %vm85 = vcmask 257024
    %86 = vst.msk [vmem:[#allocation5] sm:$0xf] %vm85, %v81
    %87 = vst.msk [vmem:[#allocation5 + $0x4] sm:$0xf] %vm85, %v82
    // Predicated region
    $region18: #{tpu_custom_call.1} parent=1 // pred_check
      _
    $region19: #{tpu_custom_call.1} parent=1 // pred_check_branch
      %89 = sbr.rel (0) target = $region21
    $region20: #{tpu_custom_call.1} parent=1 // pred_region
      %s91 = ssub.s32 128, 128
      %92 = vsyncadd [#allocation4], %s91
      %s93 = sshll.u32 [#allocation5], 4
      %s94 = int_to_ptr.vmem [resolvable:$true] %s93
      %99 = dma.vmem_to_hbm [thread:$0]  %s94, 128, %s3, [#allocation4], 64, 64, 4
    $region21: #{tpu_custom_call.1} parent=1 // pred_fallthru
      _
    // Predicated region
    $region22: #{tpu_custom_call.1} parent=1 // pred_check
      _
    $region23: #{tpu_custom_call.1} parent=1 // pred_check_branch
      %101 = sbr.rel (0) target = $region25
    $region24: #{tpu_custom_call.1} parent=1 // pred_region
      %102 = dma.done [#allocation4], 128
    $region25: #{tpu_custom_call.1} parent=1 // pred_fallthru
      _
    %103 = vsyncpa [#allocation3], 1
    %104 = vsyncpa [#allocation4], 1

</llo_original>
